<compile_context>
chip_gen: v6e
topology: v6e:2x2x1
jax: 0.10.0
libtpu: 0.0.40
codegen_flags: <defaults>
</compile_context>

<pallas_src>
import math
import functools

import jax
import jax.numpy as jnp
import numpy as np
from jax.experimental import pallas as pl
from jax.experimental.pallas import tpu as pltpu


# ---------------------------------------------------------------------------
# Pallas kernel: row-tiled GEMM + positional-embedding add
# ---------------------------------------------------------------------------
def _patch_embed_kernel(x_ref, w_ref, pe_ref, o_ref):
    # x_ref : (TM, patch_len)    rows = flattened (batch*var, patch) pairs
    # w_ref : (patch_len, d_model)  value-embedding weight (pre-transposed)
    # pe_ref: (TM, d_model)      positional embedding tile (TM % P == 0, so
    #                            every TM-row block starts at patch index 0)
    # o_ref : (TM, d_model)      bf16 (or f32) output; accumulate in f32
    acc = jnp.dot(x_ref[...], w_ref[...], preferred_element_type=jnp.float32)
    o_ref[...] = (acc + pe_ref[...]).astype(o_ref.dtype)


# Budget for the tm-proportional VMEM buffers (double-buffered in/out + PE).
_VMEM_ROW_BUDGET = 14 << 20


def _choose_row_tile(total_rows, n_patches, patch_len, d_model, out_itemsize):
    """Pick TM (rows per grid step).

    - multiple of P             -> every tile starts on a (batch*var) boundary,
                                   so one resident PE tile lines up everywhere.
    - multiple of 8 (f32) / 16 (bf16) -> sublane-aligned blocks, unmasked vst.
    - >=2 (prefer >=4) grid steps when there is enough work, so v7x's two
      TensorCores both get blocks on the 'parallel' axis.
    """
    sub = 16 if out_itemsize <= 2 else 8
    base = n_patches * sub // math.gcd(n_patches, sub)  # lcm(P, sub)
    if total_rows <= base:
        return total_rows  # block == full dim is always legal

    # Per-row VMEM bytes: double-buffered f32 input rows, double-buffered
    # output rows, (double-buffered) resident f32 PE rows.
    # TODO(synk): pipeline_mode=pl.Buffered(1) on the constant-index w/pe specs
    # would halve their VMEM footprint at large d_model.
    per_row = 2 * 4 * patch_len + 2 * out_itemsize * d_model + 2 * 4 * d_model
    budget_rows = max(base, _VMEM_ROW_BUDGET // per_row)
    tm = max(base, (min(2048, budget_rows, total_rows) // base) * base)

    # Ensure >=2 (ideally >=4) blocks so the parallel axis can be sharded
    # across v7x's two TensorCores.
    quarter = max(base, ((-(-total_rows // 4)) // base) * base)
    tm = min(tm, quarter)
    return min(tm, total_rows)


def _patch_embed_gemm(patches2d, w_t, pe_tile, tm, out_dtype):
    """patches2d: [R, patch_len]; w_t: [patch_len, d_model]; pe_tile: [TM, d_model]."""
    R, patch_len = patches2d.shape
    d_model = w_t.shape[1]
    grid = (pl.cdiv(R, tm),)
    return pl.pallas_call(
        _patch_embed_kernel,
        out_shape=jax.ShapeDtypeStruct((R, d_model), out_dtype),
        grid=grid,
        in_specs=[
            pl.BlockSpec((tm, patch_len), lambda i: (i, 0)),
            pl.BlockSpec((patch_len, d_model), lambda i: (0, 0)),
            pl.BlockSpec((tm, d_model), lambda i: (0, 0)),
        ],
        out_specs=pl.BlockSpec((tm, d_model), lambda i: (i, 0)),
        compiler_params=pltpu.CompilerParams(
            dimension_semantics=("parallel",),
            vmem_limit_bytes=32 << 20,
        ),
    )(patches2d, w_t, pe_tile)


# ---------------------------------------------------------------------------
# Positional embedding (PyTorch-buffer-equivalent), built once per config
# ---------------------------------------------------------------------------
def _positional_embedding_np(d_model, max_len=5000):
    position = np.arange(0, max_len, dtype=np.float32)[:, None]
    div_term = np.exp(
        np.arange(0, d_model, 2, dtype=np.float32) * -(math.log(10000.0) / d_model)
    )
    pe = np.zeros((max_len, d_model), dtype=np.float32)
    pe[:, 0::2] = np.sin(position * div_term)
    pe[:, 1::2] = np.cos(position * div_term)[:, : d_model // 2]
    return pe  # [max_len, d_model]


@functools.lru_cache(maxsize=None)
def _pe_tile_cached(P, tm, d_model, max_len):
    """PE tile of shape (tm, d_model), built ONCE per config (init-time hoist)."""
    assert tm % P == 0
    pe = _positional_embedding_np(d_model, max_len)[:P]
    return jnp.asarray(np.tile(pe, (tm // P, 1)), dtype=jnp.float32)


# ---------------------------------------------------------------------------
# Module-equivalent forward
# ---------------------------------------------------------------------------
@functools.partial(
    jax.jit, static_argnames=("patch_len", "stride", "padding", "tm", "out_dtype")
)
def _patch_embedding_impl(x, w_t, pe_tile, *, patch_len, stride, padding, tm, out_dtype):
    B, n_vars, L = x.shape
    d_model = w_t.shape[1]

    # ReplicationPad1d((0, padding)): replicate the last time step on the right.
    # TODO(synk): fuse the replication pad into the kernel (clamped reads for the
    # trailing patch) to remove this extra HBM read+write of x.
    if padding > 0:
        x_pad = jnp.concatenate(
            [x, jnp.repeat(x[..., -1:], padding, axis=-1)], axis=-1
        )
    else:
        x_pad = x
    Lp = L + padding
    P = (Lp - patch_len) // stride + 1
    BV = B * n_vars

    if stride == patch_len:
        # Non-overlapping unfold == pure reshape: no gathered `patches` tensor
        # materialized in HBM and re-read by the kernel.
        patches2d = x_pad[..., : P * patch_len].reshape(BV * P, patch_len)
    else:
        # TODO(synk): extract overlapping windows in-kernel (pl.ds strided reads of
        # per-series rows) to avoid materializing this duplicated gather in HBM.
        idx = jnp.arange(P)[:, None] * stride + jnp.arange(patch_len)[None, :]
        patches2d = x_pad[..., idx].reshape(BV * P, patch_len)

    out2d = _patch_embed_gemm(patches2d, w_t, pe_tile, tm, out_dtype)
    return out2d.reshape(BV, P, d_model)


def patch_embedding_forward(
    x, w_t, *, patch_len, stride, padding, out_dtype=jnp.bfloat16, max_len=5000
):
    """x: [B, n_vars, L]; w_t: [patch_len, d_model] (pre-transposed Linear weight).

    Returns (out [B*n_vars, P, d_model], n_vars) — PatchEmbedding.forward in eval
    mode (dropout = identity).  out_dtype defaults to bf16 (HBM-writeback-bound
    kernel); pass jnp.float32 to match the PyTorch dtype exactly.
    """
    B, n_vars, L = x.shape
    d_model = w_t.shape[1]
    P = (L + padding - patch_len) // stride + 1
    R = B * n_vars * P
    tm = _choose_row_tile(R, P, patch_len, d_model, jnp.dtype(out_dtype).itemsize)
    pe_tile = _pe_tile_cached(P, tm, d_model, max_len)  # built once per config
    out = _patch_embedding_impl(
        x, w_t, pe_tile,
        patch_len=patch_len, stride=stride, padding=padding,
        tm=tm, out_dtype=out_dtype,
    )
    # Dropout: eval-mode identity.
    return out, n_vars


if __name__ == "__main__":
    def run_check(B, n_vars, L, d_model, patch_len, stride, padding):
        key = jax.random.PRNGKey(0)
        kx, kw = jax.random.split(key)
        x = jax.random.normal(kx, (B, n_vars, L), dtype=jnp.float32)
        # Linear(patch_len, d_model, bias=False) weight in PyTorch layout
        # [out_features, in_features] = [d_model, patch_len].
        bound = 1.0 / math.sqrt(patch_len)
        w = jax.random.uniform(
            kw, (d_model, patch_len), minval=-bound, maxval=bound, dtype=jnp.float32
        )
        w_t = w.T  # pre-transpose once at "init" (no per-forward transpose copy)

        out, nv = patch_embedding_forward(
            x, w_t, patch_len=patch_len, stride=stride, padding=padding
        )
        out = jax.block_until_ready(out)

        # Pure-JAX reference (f32, highest precision).
        x_pad = jnp.concatenate(
            [x, jnp.repeat(x[..., -1:], padding, axis=-1)], axis=-1
        )
        P = (L + padding - patch_len) // stride + 1
        idx = jnp.arange(P)[:, None] * stride + jnp.arange(patch_len)[None, :]
        patches_ref = x_pad[..., idx].reshape(B * n_vars, P, patch_len)
        pe = jnp.asarray(_positional_embedding_np(d_model)[:P])
        ref = (
            jnp.einsum(
                "npk,dk->npd", patches_ref, w, precision=jax.lax.Precision.HIGHEST
            )
            + pe[None]
        )
        assert out.shape == (B * n_vars, P, d_model)
        assert out.dtype == jnp.bfloat16
        assert nv == n_vars
        np.testing.assert_allclose(
            np.asarray(out, dtype=np.float32), np.asarray(ref), rtol=3e-2, atol=3e-2
        )

    # Config 1: non-overlapping patches (stride == patch_len) -> reshape fast
    # path, single full block (d_model = 128 keeps stores lane-dense).
    run_check(B=2, n_vars=4, L=16, d_model=128, patch_len=8, stride=8, padding=8)
    # Config 2: overlapping patches + multi-block grid (exercises the parallel
    # row-tiled pipeline and the gather fallback).
    run_check(B=2, n_vars=4, L=128, d_model=128, patch_len=16, stride=8, padding=8)

    print("KERNEL_OK")
</pallas_src>

<mosaic_0001>
module attributes {stable_mosaic.version = 11 : i64} {
  func.func @_patch_embed_kernel(%arg0: i32, %arg1: memref<24x8xf32, #tpu.memory_space<vmem>>, %arg2: memref<8x128xf32, #tpu.memory_space<vmem>>, %arg3: memref<24x128xf32, #tpu.memory_space<vmem>>, %arg4: memref<24x128xbf16, #tpu.memory_space<vmem>>) attributes {dimension_semantics = [#tpu.dimension_semantics<parallel>], iteration_bounds = array<i64: 1>, scalar_prefetch = 0 : i64, scratch_operands = 0 : i64, tpu.core_type = #tpu.core_type<tc>, window_params = [{transform_indices = @transform_0, window_bounds = array<i64: 24, 8>}, {pipeline_mode = #tpu.pipeline_mode<synchronous>, transform_indices = @transform_1, window_bounds = array<i64: 8, 128>}, {pipeline_mode = #tpu.pipeline_mode<synchronous>, transform_indices = @transform_2, window_bounds = array<i64: 24, 128>}, {transform_indices = @transform_3, window_bounds = array<i64: 24, 128>}]} {
    %c0 = arith.constant 0 : index
    %c0_0 = arith.constant 0 : index
    %0 = vector.load %arg1[%c0, %c0_0] : memref<24x8xf32, #tpu.memory_space<vmem>>, vector<24x8xf32>
    %c0_1 = arith.constant 0 : index
    %c0_2 = arith.constant 0 : index
    %1 = vector.load %arg2[%c0_1, %c0_2] : memref<8x128xf32, #tpu.memory_space<vmem>>, vector<8x128xf32>
    %cst = arith.constant dense<0.000000e+00> : vector<24x128xf32>
    %2 = tpu.matmul %0, %1, %cst {dimension_numbers = #tpu.dot_dimension_numbers<[1], [0], [0], [1], [0, 0, 1, 1], [], []>} : vector<24x8xf32>, vector<8x128xf32>, vector<24x128xf32> -> vector<24x128xf32>
    %c0_3 = arith.constant 0 : index
    %c0_4 = arith.constant 0 : index
    %3 = vector.load %arg3[%c0_3, %c0_4] : memref<24x128xf32, #tpu.memory_space<vmem>>, vector<24x128xf32>
    %4 = arith.addf %2, %3 : vector<24x128xf32>
    %5 = arith.truncf %4 : vector<24x128xf32> to vector<24x128xbf16>
    %c0_5 = arith.constant 0 : index
    %c0_6 = arith.constant 0 : index
    %6 = vector.load %arg4[%c0_5, %c0_6] : memref<24x128xbf16, #tpu.memory_space<vmem>>, vector<24x128xbf16>
    tpu.vector_store %arg4[%c0_5, %c0_6], %5 {strides = array<i32>} : memref<24x128xbf16, #tpu.memory_space<vmem>>, vector<24x128xbf16>,
    return
  }
  func.func @transform_0(%arg0: i32) -> (i32, i32) {
    %c0_i32 = arith.constant 0 : i32
    %c0_i32_0 = arith.constant 0 : i32
    return %arg0, %c0_i32 : i32, i32
  }
  func.func @transform_1(%arg0: i32) -> (i32, i32) {
    %c0_i32 = arith.constant 0 : i32
    %c0_i32_0 = arith.constant 0 : i32
    %c0_i32_1 = arith.constant 0 : i32
    return %c0_i32, %c0_i32_0 : i32, i32
  }
  func.func @transform_2(%arg0: i32) -> (i32, i32) {
    %c0_i32 = arith.constant 0 : i32
    %c0_i32_0 = arith.constant 0 : i32
    %c0_i32_1 = arith.constant 0 : i32
    return %c0_i32, %c0_i32_0 : i32, i32
  }
  func.func @transform_3(%arg0: i32) -> (i32, i32) {
    %c0_i32 = arith.constant 0 : i32
    %c0_i32_0 = arith.constant 0 : i32
    return %arg0, %c0_i32 : i32, i32
  }
}

</mosaic_0001>

<llo_original>
// kernel: _patch_embedding_impl.1
$region0: #{_patch_embedding_impl.1}
  #allocation0 [shape = 'u32[]', space=smem, size = 0x4, offset = 0x4, fixed_abs, tag = 'smem constant byte address 0x4 - core index']
  #allocation1 [shape = 'u32[144,128]{1,0:T(1,128)}', space=vmem, size = 0x12000, scoped, tag = 'internal scratch']
  %s0 = inlined_call_operand.vmem [shape: f32[24,8], index: 0, kind: input, shape index: {}]
  %s1 = inlined_call_operand.vmem [shape: f32[8,128], index: 1, kind: input, shape index: {}]
  %s2 = inlined_call_operand.vmem [shape: f32[24,128], index: 2, kind: input, shape index: {}]
  %s3 = inlined_call_operand.vmem [shape: bf16[24,128], index: 3, kind: output, shape index: {}]
  %s4 = sld [smem:[#allocation0]]
  $region22: #{_patch_embedding_impl.1} parent=0
    _
  %s6 = ssub.s32 1, %s4
  %s7 = scalar_select 0, %s6, %s4
  // Predicated region
  $region2: #{_patch_embedding_impl.1} parent=0 // pred_check
    _
  $region3: #{_patch_embedding_impl.1} parent=0 // pred_check_branch
    %9 = sbr.rel (0) target = $region5
  $region4: #{_patch_embedding_impl.1} parent=0 // pred_region
    _
  $region5: #{_patch_embedding_impl.1} parent=0 // pred_fallthru
    _
  // Predicated region
  $region6: #{_patch_embedding_impl.1} parent=0 // pred_check
    _
  $region7: #{_patch_embedding_impl.1} parent=0 // pred_check_branch
    %11 = sbr.rel (0) target = $region9
  $region8: #{_patch_embedding_impl.1} parent=0 // pred_region
    _
  $region9: #{_patch_embedding_impl.1} parent=0 // pred_fallthru
    _
  // Predicated region
  $region10: #{_patch_embedding_impl.1} parent=0 // pred_check
    _
  $region11: #{_patch_embedding_impl.1} parent=0 // pred_check_branch
    %13 = sbr.rel (0) target = $region13
  $region12: #{_patch_embedding_impl.1} parent=0 // pred_region
    _
  $region13: #{_patch_embedding_impl.1} parent=0 // pred_fallthru
    _
  %v14 = vld [vmem:[%s0] sm:$0xff]
  %v15 = vld [vmem:[%s0 + $0x8] sm:$0xff]
  %v16 = vld [vmem:[%s0 + $0x10] sm:$0xff]
  %v17 = vld [vmem:[%s1] sm:$0xff]
  %v18 = vld [vmem:[%s2] sm:$0xff]
  %v19 = vld [vmem:[%s2 + $0x8] sm:$0xff]
  %v20 = vld [vmem:[%s2 + $0x10] sm:$0xff]
  %vm21 = vcmask 64512
  %v23 = vsel %vm21, %v14, 0
  %v26 = vsel %vm21, %v15, 0
  %v29 = vsel %vm21, %v16, 0
  %31 = vmatprep.subr.mxu0 0.0
  %32 = vmatpush1.msra.mxu0 0.0
  %33 = vmatprep.subr.mxu0 0.0
  %34 = vmatpush1.msra.mxu0 0.0
  %35 = vmatprep.subr.mxu0 0.0
  %36 = vmatpush1.msra.mxu0 0.0
  %37 = vmatprep.subr.mxu0 0.0
  %38 = vmatpush1.msra.mxu0 0.0
  %39 = vmatprep.subr.mxu0 0.0
  %40 = vmatpush1.msra.mxu0 0.0
  %41 = vmatprep.subr.mxu0 0.0
  %42 = vmatpush1.msra.mxu0 0.0
  %43 = vmatprep.subr.mxu0 0.0
  %44 = vmatpush1.msra.mxu0 0.0
  %45 = vmatprep.subr.mxu0 0.0
  %46 = vmatpush1.msra.mxu0 0.0
  %47 = vmatprep.subr.mxu0 0.0
  %48 = vmatpush1.msra.mxu0 0.0
  %49 = vmatprep.subr.mxu0 0.0
  %50 = vmatpush1.msra.mxu0 0.0
  %51 = vmatprep.subr.mxu0 0.0
  %52 = vmatpush1.msra.mxu0 0.0
  %53 = vmatprep.subr.mxu0 0.0
  %54 = vmatpush1.msra.mxu0 0.0
  %55 = vmatprep.subr.mxu0 0.0
  %56 = vmatpush1.msra.mxu0 0.0
  %57 = vmatprep.subr.mxu0 0.0
  %58 = vmatpush1.msra.mxu0 0.0
  %59 = vmatprep.subr.mxu0 0.0
  %60 = vmatpush1.msra.mxu0 0.0
  %61 = vmatprep.subr.mxu0 0.0
  %62 = vmatpush1.msra.mxu0 %v17
  %63 = vmatprep.subr.mxu0 0.0
  %64 = vmatpush2.msra.mxu0 0.0
  %65 = vmatprep.subr.mxu0 0.0
  %66 = vmatpush2.msra.mxu0 0.0
  %67 = vmatprep.subr.mxu0 0.0
  %68 = vmatpush2.msra.mxu0 0.0
  %69 = vmatprep.subr.mxu0 0.0
  %70 = vmatpush2.msra.mxu0 0.0
  %71 = vmatprep.subr.mxu0 0.0
  %72 = vmatpush2.msra.mxu0 0.0
  %73 = vmatprep.subr.mxu0 0.0
  %74 = vmatpush2.msra.mxu0 0.0
  %75 = vmatprep.subr.mxu0 0.0
  %76 = vmatpush2.msra.mxu0 0.0
  %77 = vmatprep.subr.mxu0 0.0
  %78 = vmatpush2.msra.mxu0 0.0
  %79 = vmatprep.subr.mxu0 0.0
  %80 = vmatpush2.msra.mxu0 0.0
  %81 = vmatprep.subr.mxu0 0.0
  %82 = vmatpush2.msra.mxu0 0.0
  %83 = vmatprep.subr.mxu0 0.0
  %84 = vmatpush2.msra.mxu0 0.0
  %85 = vmatprep.subr.mxu0 0.0
  %86 = vmatpush2.msra.mxu0 0.0
  %87 = vmatprep.subr.mxu0 0.0
  %88 = vmatpush2.msra.mxu0 0.0
  %89 = vmatprep.subr.mxu0 0.0
  %90 = vmatpush2.msra.mxu0 0.0
  %91 = vmatprep.subr.mxu0 0.0
  %92 = vmatpush2.msra.mxu0 0.0
  %93 = vmatprep.subr.mxu0 0.0
  %94 = vmatpush2.msra.mxu0 0.0
  %95 = vmatprep.mubr.f32.mxu0 0.0
  %96 = vmatmul.mubr.f32.gmra.mxu0 %v23
  %v97 = vpop.f32.mrf.mxu0
  %v98 = vadd.f32 %v18, %v97
  %v99 = vpop.f32.mrf.mxu0
  %100 = vmatprep.mubr.f32.mxu0 0.0
  %101 = vmatmul.mubr.f32.gmra.mxu0 %v26
  %v102 = vpop.f32.mrf.mxu0
  %v103 = vadd.f32 %v19, %v102
  %v104 = vpop.f32.mrf.mxu0
  %105 = vmatprep.mubr.f32.mxu0 0.0
  %106 = vmatmul.mubr.f32.gmra.mxu0 %v29
  %v107 = vpop.f32.mrf.mxu0
  %v108 = vadd.f32 %v20, %v107
  %v109 = vpop.f32.mrf.mxu0
  %110 = vdwg.mxu0
  %v111 = vpack.c.bf16 %v103, %v98
  %v112 = vpack.c.bf16 %v108, %v108
  %v115 = vunpack.c.l.b16 %v111
  %v116 = vunpack.c.h.b16 %v111
  %v117 = vunpack.c.l.b16 %v112
  %v118 = vpack.c.b16 %v115, %v115
  %v119 = vpack.c.b16 %v116, %v116
  %v120 = vpack.c.b16 %v117, %v117
  %124 = vst [vmem:[%s3] sm:$0xf] %v118
  %125 = vst [vmem:[%s3 + $0x4] sm:$0xf] %v119
  %126 = vst [vmem:[%s3 + $0x8] sm:$0xf] %v120
  // Predicated region
  $region14: #{_patch_embedding_impl.1} parent=0 // pred_check
    _
  $region15: #{_patch_embedding_impl.1} parent=0 // pred_check_branch
    %128 = sbr.rel (0) target = $region17
  $region16: #{_patch_embedding_impl.1} parent=0 // pred_region
    _
  $region17: #{_patch_embedding_impl.1} parent=0 // pred_fallthru
    _
  // Predicated region
  $region18: #{_patch_embedding_impl.1} parent=0 // pred_check
    _
  $region19: #{_patch_embedding_impl.1} parent=0 // pred_check_branch
    %130 = sbr.rel (0) target = $region21
  $region20: #{_patch_embedding_impl.1} parent=0 // pred_region
    _
  $region21: #{_patch_embedding_impl.1} parent=0 // pred_fallthru
    _

</llo_original>
